<compile_context>
chip_gen: v5e
topology: v5e:2x2
jax: 0.10.0
libtpu: 0.0.40
codegen_flags: <defaults>
</compile_context>

<pallas_src>
import jax
import jax.numpy as jnp
from jax.experimental import pallas as pl
from jax.experimental.pallas import tpu as pltpu

LANE_WIDTH = 1024          # lane-dense slab width (multiple of 128)
BLOCK_BYTES = 4 << 20      # ~4 MiB per block: double-buffered in+out = 16 MiB VMEM
SMALL_N_THRESHOLD = 4096   # below this, plain fused XLA beats any pallas_call


def _round_up(a: int, m: int) -> int:
    return ((a + m - 1) // m) * m


def _sublane_multiple(dtype) -> int:
    # f32 -> 8, bf16 -> 16, int8/fp8 -> 32
    return max(8, 32 // jnp.dtype(dtype).itemsize)


def linear_kernel(w_ref, b_ref, x_ref, o_ref):
    # y = x * w + b : one VPU FMA per vreg; w/b are f32 SMEM scalars (free broadcast).
    w = w_ref[0, 0]
    b = b_ref[0, 0]
    o_ref[...] = (x_ref[...].astype(jnp.float32) * w + b).astype(o_ref.dtype)


def linear_forward(x, weight, bias, *,
                   lane_width=LANE_WIDTH,
                   block_bytes=BLOCK_BYTES,
                   small_n_threshold=SMALL_N_THRESHOLD):
    """Forward of nn.Linear(1, 1): x (N, 1) -> (N, 1).  weight (1, 1), bias (1,)."""
    n, in_f = x.shape
    assert in_f == 1, "LinearRegression has in_features=1"
    dtype = x.dtype

    w_scalar = weight.reshape(1, 1).astype(jnp.float32)
    b_scalar = bias.reshape(1, 1).astype(jnp.float32)

    # --- tiny-batch fast path: fused XLA elementwise op, no pad/launch overhead ---
    if n < small_n_threshold:
        y = x.astype(jnp.float32) * w_scalar[0, 0] + b_scalar[0, 0]
        return y.astype(dtype)

    itemsize = jnp.dtype(dtype).itemsize
    sub = _sublane_multiple(dtype)

    # Lane-dense slab: (N,1) -> flat (free, contiguous) -> (rows, lane_width).
    # Pad only to the next lane multiple, and only when misaligned.
    flat = x.reshape(-1)
    pad = (-n) % lane_width
    if pad:
        flat = jnp.pad(flat, (0, pad))
    rows = flat.shape[0] // lane_width
    x2d = flat.reshape(rows, lane_width)

    # Block sizing: ~block_bytes per block amortizes per-step overhead; prefer >=2
    # grid steps so both v7x TensorCores get work. Ragged last block is masked by Pallas.
    target_rows = max(sub, block_bytes // (lane_width * itemsize))
    if rows <= 2 * sub:
        tile_rows = rows                      # single full-extent block
    else:
        tile_rows = min(target_rows, _round_up(pl.cdiv(rows, 2), sub))
    grid_rows = pl.cdiv(rows, tile_rows)

    tile_bytes = tile_rows * lane_width * itemsize
    # in + out, double-buffered, plus slack. Stays well under v7x's 64 MiB physical VMEM;
    # the explicit limit is load-bearing on v5e (16 MiB default scoped VMEM).
    vmem_limit = min(48 << 20, max(32 << 20, 4 * tile_bytes + (2 << 20)))

    out2d = pl.pallas_call(
        linear_kernel,
        out_shape=jax.ShapeDtypeStruct((rows, lane_width), dtype),
        grid=(grid_rows,),
        in_specs=[
            pl.BlockSpec(memory_space=pltpu.MemorySpace.SMEM),     # weight scalar
            pl.BlockSpec(memory_space=pltpu.MemorySpace.SMEM),     # bias scalar
            # If an xprof trace shows exposed DMA wait, add pipeline_mode=pl.Buffered(3).
            pl.BlockSpec((tile_rows, lane_width), lambda i: (i, 0)),
        ],
        out_specs=pl.BlockSpec((tile_rows, lane_width), lambda i: (i, 0)),
        compiler_params=pltpu.CompilerParams(
            dimension_semantics=("parallel",),   # shard across TCs on v7x
            vmem_limit_bytes=vmem_limit,
        ),
    )(w_scalar, b_scalar, x2d)

    out_flat = out2d.reshape(-1)
    if pad:
        out_flat = out_flat[:n]                 # strip tail only when we actually padded
    return out_flat.reshape(n, 1)


if __name__ == "__main__":
    key = jax.random.PRNGKey(0)
    kx, kw, kb = jax.random.split(key, 3)

    # nn.Linear(1, 1) params: weight (1, 1), bias (1,)
    weight = jax.random.uniform(kw, (1, 1), dtype=jnp.float32, minval=-1.0, maxval=1.0)
    bias = jax.random.uniform(kb, (1,), dtype=jnp.float32, minval=-1.0, maxval=1.0)

    def ref(x):
        return x @ weight.T + bias

    ok = True

    # 1) Tiny batch (fast path, matches the training-loop style usage).
    x_small = jax.random.normal(kx, (8, 1), dtype=jnp.float32)
    y = linear_forward(x_small, weight, bias)
    jax.block_until_ready(y)
    ok &= bool(jnp.allclose(y, ref(x_small), atol=1e-6)) and y.shape == (8, 1)

    # 2) Same tiny batch forced through the Pallas kernel (exercises pad + single block).
    y = linear_forward(x_small, weight, bias, small_n_threshold=0)
    jax.block_until_ready(y)
    ok &= bool(jnp.allclose(y, ref(x_small), atol=1e-6)) and y.shape == (8, 1)

    # 3) Lane-aligned batch, multi-block grid (zero-copy reshape path, 2 grid steps).
    n_big = 20 * LANE_WIDTH
    x_big = jax.random.normal(kx, (n_big, 1), dtype=jnp.float32)
    y = linear_forward(x_big, weight, bias)
    jax.block_until_ready(y)
    ok &= bool(jnp.allclose(y, ref(x_big), atol=1e-6)) and y.shape == (n_big, 1)

    # 4) Misaligned batch (pad-to-lane + ragged last block + tail strip).
    n_odd = 20 * LANE_WIDTH - 483
    x_odd = jax.random.normal(kx, (n_odd, 1), dtype=jnp.float32)
    y = linear_forward(x_odd, weight, bias)
    jax.block_until_ready(y)
    ok &= bool(jnp.allclose(y, ref(x_odd), atol=1e-6)) and y.shape == (n_odd, 1)

    assert ok, "mismatch vs reference"
    print("KERNEL_OK")
</pallas_src>

<mosaic_0001>
module attributes {stable_mosaic.version = 11 : i64} {
  func.func @linear_kernel(%arg0: i32, %arg1: memref<1x1xf32, #tpu.memory_space<smem>>, %arg2: memref<1x1xf32, #tpu.memory_space<smem>>, %arg3: memref<1x1024xf32, #tpu.memory_space<vmem>>, %arg4: memref<1x1024xf32, #tpu.memory_space<vmem>>) attributes {dimension_semantics = [#tpu.dimension_semantics<parallel>], iteration_bounds = array<i64: 1>, scalar_prefetch = 0 : i64, scratch_operands = 0 : i64, tpu.core_type = #tpu.core_type<tc>, window_params = [{transform_indices = @transform_0, window_bounds = array<i64: 1, 1>}, {transform_indices = @transform_1, window_bounds = array<i64: 1, 1>}, {transform_indices = @transform_2, window_bounds = array<i64: 1, 1024>}, {transform_indices = @transform_3, window_bounds = array<i64: 1, 1024>}]} {
    %c0 = arith.constant 0 : index
    %c0_0 = arith.constant 0 : index
    %0 = memref.load %arg1[%c0, %c0_0] : memref<1x1xf32, #tpu.memory_space<smem>>
    %c0_1 = arith.constant 0 : index
    %c0_2 = arith.constant 0 : index
    %1 = memref.load %arg2[%c0_1, %c0_2] : memref<1x1xf32, #tpu.memory_space<smem>>
    %c0_3 = arith.constant 0 : index
    %c0_4 = arith.constant 0 : index
    %2 = vector.load %arg3[%c0_3, %c0_4] : memref<1x1024xf32, #tpu.memory_space<vmem>>, vector<1x1024xf32>
    %3 = vector.broadcast %0 : f32 to vector<1x1024xf32>
    %4 = arith.mulf %2, %3 : vector<1x1024xf32>
    %5 = vector.broadcast %1 : f32 to vector<1x1024xf32>
    %6 = arith.addf %4, %5 : vector<1x1024xf32>
    %c0_5 = arith.constant 0 : index
    %c0_6 = arith.constant 0 : index
    %7 = vector.load %arg4[%c0_5, %c0_6] : memref<1x1024xf32, #tpu.memory_space<vmem>>, vector<1x1024xf32>
    tpu.vector_store %arg4[%c0_5, %c0_6], %6 {strides = array<i32>} : memref<1x1024xf32, #tpu.memory_space<vmem>>, vector<1x1024xf32>,
    return
  }
  func.func @transform_0(%arg0: i32) -> (i32, i32) {
    %c0_i32 = arith.constant 0 : i32
    %c0_i32_0 = arith.constant 0 : i32
    %c0_i32_1 = arith.constant 0 : i32
    return %c0_i32, %c0_i32_0 : i32, i32
  }
  func.func @transform_1(%arg0: i32) -> (i32, i32) {
    %c0_i32 = arith.constant 0 : i32
    %c0_i32_0 = arith.constant 0 : i32
    %c0_i32_1 = arith.constant 0 : i32
    return %c0_i32, %c0_i32_0 : i32, i32
  }
  func.func @transform_2(%arg0: i32) -> (i32, i32) {
    %c0_i32 = arith.constant 0 : i32
    %c0_i32_0 = arith.constant 0 : i32
    return %arg0, %c0_i32 : i32, i32
  }
  func.func @transform_3(%arg0: i32) -> (i32, i32) {
    %c0_i32 = arith.constant 0 : i32
    %c0_i32_0 = arith.constant 0 : i32
    return %arg0, %c0_i32 : i32, i32
  }
}

</mosaic_0001>

<llo_original>
// kernel: tpu_custom_call.1
$region0: #{tpu_custom_call.1}
  #allocation0 [shape = 'u32[]', space=smem, size = 0x4, offset = 0x4, fixed_abs, tag = 'smem constant byte address 0x4 - core index']
  #allocation1 [shape = 'u32[72,128]{1,0:T(1,128)}', space=vmem, size = 0x9000, scoped, tag = 'internal scratch']
  #allocation2 [shape = 'f32[1,1]{1,0:T(1,128)S(6)}', space=smem, size = 0x200, scoped, tag = 'scoped memory for tpu_custom_call.1']
  #allocation3 [shape = 'f32[1,1]{1,0:T(1,128)S(6)}', space=smem, size = 0x200, scoped, tag = 'scoped memory for tpu_custom_call.1']
  %s0 = inlined_call_operand.<no memory space> [shape: f32[1,1], index: 0, kind: input, shape index: {}]
  %s1 = inlined_call_operand.<no memory space> [shape: f32[1,1], index: 1, kind: input, shape index: {}]
  %s2 = inlined_call_operand.hbm [shape: f32[1,1024], index: 2, kind: input, shape index: {}]
  %s3 = inlined_call_operand.hbm [shape: f32[1,1024], index: 3, kind: output, shape index: {}]
  %s4 = sld [smem:[#allocation0]]
  $region26: #{tpu_custom_call.1} parent=0
    _
  %s6 = ssub.s32 1, %s4
  %s7 = scalar_select 0, %s6, %s4
  %8 = sst [smem:[#allocation2]] %s0
  %9 = sst [smem:[#allocation3]] %s1
  $region1: #{tpu_custom_call.1} parent=0
    #allocation4 [shape = 'u8[4096]{0}', space=vmem, size = 0x1000, scoped, tag = 'input window, operand 2, single buffered']
    #allocation5 [shape = 's32[1]{0}', space=sflag, size = 0x4, scoped, tag = 'scoped memory for tpu_custom_call.1']
    #allocation6 [shape = 's32[1]{0}', space=sflag, size = 0x4, scoped, tag = 'scoped memory for tpu_custom_call.1']
    #allocation7 [shape = 'u8[4096]{0}', space=vmem, size = 0x1000, scoped, tag = 'output window, operand 0, single buffered']
    %10 = vsyncpa [#allocation5], 0
    %11 = vsyncpa [#allocation6], 0
    // Predicated region
    $region2: #{tpu_custom_call.1} parent=1 // pred_check
      _
    $region3: #{tpu_custom_call.1} parent=1 // pred_check_branch
      %13 = sbr.rel (0) target = $region5
    $region4: #{tpu_custom_call.1} parent=1 // pred_region
      _
    $region5: #{tpu_custom_call.1} parent=1 // pred_fallthru
      _
    // Predicated region
    $region6: #{tpu_custom_call.1} parent=1 // pred_check
      _
    $region7: #{tpu_custom_call.1} parent=1 // pred_check_branch
      %15 = sbr.rel (0) target = $region9
    $region8: #{tpu_custom_call.1} parent=1 // pred_region
      _
    $region9: #{tpu_custom_call.1} parent=1 // pred_fallthru
      _
    // Predicated region
    $region10: #{tpu_custom_call.1} parent=1 // pred_check
      _
    $region11: #{tpu_custom_call.1} parent=1 // pred_check_branch
      %17 = sbr.rel (0) target = $region13
    $region12: #{tpu_custom_call.1} parent=1 // pred_region
      %19 = vsyncadd [#allocation5], 0
      %s21 = sshll.u32 %s2, 4
      %s22 = int_to_ptr.hbm [resolvable:$true] %s21
      %s23 = sshll.u32 [#allocation4], 4
      %s24 = int_to_ptr.vmem [resolvable:$true] %s23
      %26 = dma.hbm_to_vmem [thread:$0]  %s22, 128, %s24, [#allocation5]
    $region13: #{tpu_custom_call.1} parent=1 // pred_fallthru
      _
    // Predicated region
    $region14: #{tpu_custom_call.1} parent=1 // pred_check
      _
    $region15: #{tpu_custom_call.1} parent=1 // pred_check_branch
      %28 = sbr.rel (0) target = $region17
    $region16: #{tpu_custom_call.1} parent=1 // pred_region
      %30 = dma.done [#allocation5], 128
    $region17: #{tpu_custom_call.1} parent=1 // pred_fallthru
      _
    %s31 = sld [smem:[#allocation2]]
    %s32 = sld [smem:[#allocation3]]
    %v33 = vld [vmem:[#allocation4] sm:$0xff]
    %v34 = vstv %s31
    %v35 = vmul.f32 %v33, %v34
    %v36 = vstv %s32
    %v37 = vadd.f32 %v35, %v36
    %38 = vst [vmem:[#allocation7] sm:$0xff] %v37
    // Predicated region
    $region18: #{tpu_custom_call.1} parent=1 // pred_check
      _
    $region19: #{tpu_custom_call.1} parent=1 // pred_check_branch
      %40 = sbr.rel (0) target = $region21
    $region20: #{tpu_custom_call.1} parent=1 // pred_region
      %42 = vsyncadd [#allocation6], 0
      %s44 = sshll.u32 [#allocation7], 4
      %s45 = int_to_ptr.vmem [resolvable:$true] %s44
      %s46 = sshll.u32 %s3, 4
      %s47 = int_to_ptr.hbm [resolvable:$true] %s46
      %49 = dma.vmem_to_hbm [thread:$0]  %s45, 128, %s47, [#allocation6]
    $region21: #{tpu_custom_call.1} parent=1 // pred_fallthru
      _
    // Predicated region
    $region22: #{tpu_custom_call.1} parent=1 // pred_check
      _
    $region23: #{tpu_custom_call.1} parent=1 // pred_check_branch
      %51 = sbr.rel (0) target = $region25
    $region24: #{tpu_custom_call.1} parent=1 // pred_region
      %53 = dma.done [#allocation6], 128
    $region25: #{tpu_custom_call.1} parent=1 // pred_fallthru
      _
    %54 = vsyncpa [#allocation5], 1
    %55 = vsyncpa [#allocation6], 1

</llo_original>
